<compile_context>
chip_gen: v5e
topology: v5e:2x2
jax: 0.10.0
libtpu: 0.0.40
codegen_flags: <defaults>
</compile_context>

<pallas_src>
import math

import jax
import jax.numpy as jnp
import numpy as np
from jax.experimental import pallas as pl
from jax.experimental.pallas import tpu as pltpu

_GELU_C = math.sqrt(2.0 / math.pi)
_GELU_C3 = _GELU_C * 0.044715          # folded constant (one fewer VPU mul)


# ---------------------------------------------------------------------------
# Kernel 1: weight generation (WeightGenerator forward)
#   out = tanh( sum_l subset[l] * wl[l] ) * W + B         (emitted in out_dtype)
# Tiled over (sublane, lane) dims so a GPT/BERT sized weight never needs one
# giant VMEM block; subsets may be stored bf16 (upcast to f32 in-kernel).
# ---------------------------------------------------------------------------
def _gen_weight_kernel(subset_ref, wl_ref, w_ref, b_ref, out_ref):
    # subset: (L, tm, tn) VMEM; wl: (L,) SMEM; w/b: (tm, tn) f32; out: (tm, tn)
    L = subset_ref.shape[0]
    acc = subset_ref[0].astype(jnp.float32) * wl_ref[0]
    for l in range(1, L):                      # L (adjacent layers) tiny -> unroll
        acc = acc + subset_ref[l].astype(jnp.float32) * wl_ref[l]
    out_ref[...] = (jnp.tanh(acc) * w_ref[...] + b_ref[...]).astype(out_ref.dtype)


def generate_weight(subset, wl, W, B, *, out_dtype=jnp.float32,
                    tile_m=512, tile_n=512):
    L, M, N = subset.shape
    tm = M if M <= tile_m else tile_m          # 512: multiple of 8
    tn = N if N <= tile_n else tile_n          # 512: multiple of 128
    grid = (pl.cdiv(M, tm), pl.cdiv(N, tn))
    out_bytes = jnp.dtype(out_dtype).itemsize
    sub_bytes = jnp.dtype(subset.dtype).itemsize
    need = (L * sub_bytes + 2 * 4 + out_bytes) * tm * tn * 2   # double-buffered
    vmem_limit = max(32 << 20, int(need * 1.25) + (4 << 20))
    return pl.pallas_call(
        _gen_weight_kernel,
        out_shape=jax.ShapeDtypeStruct((M, N), out_dtype),
        grid=grid,
        in_specs=[
            pl.BlockSpec((L, tm, tn), lambda i, j: (0, i, j)),
            pl.BlockSpec(memory_space=pltpu.MemorySpace.SMEM),
            pl.BlockSpec((tm, tn), lambda i, j: (i, j)),
            pl.BlockSpec((tm, tn), lambda i, j: (i, j)),
        ],
        out_specs=pl.BlockSpec((tm, tn), lambda i, j: (i, j)),
        compiler_params=pltpu.CompilerParams(
            dimension_semantics=("parallel", "parallel"),
            vmem_limit_bytes=vmem_limit),
    )(subset, jnp.asarray(wl, jnp.float32), W, B)


def generate_bias(subset, wl, W, B):
    # BiasGenerator forward: a few KB -> plain JAX (a kernel launch costs more).
    return jnp.tanh(jnp.einsum("ln,l->n", subset, wl)) * W + B


# ---------------------------------------------------------------------------
# Kernel 2: fused StudentMLP  y = gelu_new(x @ W1 + b1) @ W2 + b2
# Grid: (row tiles [parallel], intermediate tiles [arbitrary/reduction]).
# ---------------------------------------------------------------------------
def _student_mlp_kernel(x_ref, w1_ref, b1_ref, w2_ref, b2_ref, out_ref, acc_ref):
    k = pl.program_id(1)

    @pl.when(k == 0)
    def _():
        acc_ref[...] = jnp.zeros_like(acc_ref)

    w1 = w1_ref[...]                                  # (H, tI)
    x = x_ref[...].astype(w1.dtype)                   # f32 -> bf16 cast on the VPU
    h = jnp.dot(x, w1, preferred_element_type=jnp.float32) + b1_ref[...]
    # gelu_new, f32 epilogue (tanh -> EUP, constants folded)
    h = 0.5 * h * (1.0 + jnp.tanh(_GELU_C * h + _GELU_C3 * (h * h * h)))
    w2 = w2_ref[...]                                  # (tI, H)
    acc_ref[...] += jnp.dot(h.astype(w2.dtype), w2,
                            preferred_element_type=jnp.float32)

    @pl.when(k == pl.num_programs(1) - 1)
    def _():
        # TODO(synk): nn.Dropout(resid_pdrop) is identity in eval mode.
        out_ref[...] = (acc_ref[...] + b2_ref[...]).astype(out_ref.dtype)


def _choose_row_tile(nrows, target):
    """Largest 8-aligned row tile <= target; for moderate nrows force >= 2 grid
    steps so the 'parallel' row axis can shard across v7x's two TensorCores."""
    if nrows <= 8:
        return nrows
    target = max(8, (target // 8) * 8)
    if nrows > target:
        return target
    if nrows >= 16:
        half = -(-nrows // 2)              # cdiv(nrows, 2)
        return ((half + 7) // 8) * 8
    return nrows                            # 9..15: single full-dim block


def _choose_i_tile(I, H, w_bytes, budget_bytes):
    """Keep W1/W2 fully resident when their double-buffered blocks fit the
    budget; otherwise pick the largest multiple-of-128 divisor of I that fits
    (restores weight-tile pipelining and fits v7x's 64 MiB VMEM)."""
    per_i = 2 * H * w_bytes * 2            # W1 column + W2 row, x2 double-buffer
    if I * per_i <= budget_bytes:
        return I
    best = None
    t = 128
    while t < I:
        if I % t == 0 and t * per_i <= budget_bytes:
            best = t
        t += 128
    return best if best is not None else I


def student_mlp(hidden_states, w1, b1, w2, b2, *, matmul_dtype=None,
                row_tile_target=512, weight_vmem_budget=32 << 20):
    """y = gelu_new(x @ w1 + b1) @ w2 + b2 fused in one kernel.

    w1: (H, I), w2: (I, H) -- already transposed for NN matmuls.  x stays f32
    in HBM and is cast to the weight dtype inside the kernel.
    """
    orig_shape = hidden_states.shape
    out_dtype = hidden_states.dtype
    H = orig_shape[-1]
    I = w1.shape[1]
    assert w1.shape == (H, I) and w2.shape == (I, H)
    nrows = int(np.prod(orig_shape[:-1]))

    x2 = hidden_states.reshape(nrows, H)
    if matmul_dtype is not None and w1.dtype != matmul_dtype:
        # No-op on the fast path: generate_weight already emitted matmul_dtype.
        w1 = w1.astype(matmul_dtype)
        w2 = w2.astype(matmul_dtype)
    b1_2 = b1.reshape(1, I).astype(jnp.float32)
    b2_2 = b2.reshape(1, H).astype(jnp.float32)

    w_bytes = jnp.dtype(w1.dtype).itemsize
    x_bytes = jnp.dtype(x2.dtype).itemsize
    o_bytes = jnp.dtype(out_dtype).itemsize

    tr = _choose_row_tile(nrows, row_tile_target)
    tI = _choose_i_tile(I, H, w_bytes, weight_vmem_budget)
    nI = I // tI if (I % tI == 0) else 1
    if nI == 1:
        tI = I

    # Size the VMEM request from actual need (don't claim all of v7x's 64 MiB).
    need = (2 * H * tI * w_bytes * 2            # W1 + W2 blocks, double-buffered
            + (tI + H) * 4 * 2 * 2              # biases (tiny)
            + tr * H * (x_bytes + o_bytes) * 2  # x / out tiles, double-buffered
            + tr * H * 4                        # f32 accumulator scratch
            + tr * tI * 4 * 3)                  # h + gelu temporaries
    vmem_limit = max(32 << 20, int(need * 1.25) + (4 << 20))

    out = pl.pallas_call(
        _student_mlp_kernel,
        out_shape=jax.ShapeDtypeStruct((nrows, H), out_dtype),
        grid=(pl.cdiv(nrows, tr), nI),
        in_specs=[
            pl.BlockSpec((tr, H), lambda i, k: (i, 0)),
            pl.BlockSpec((H, tI), lambda i, k: (0, k)),
            pl.BlockSpec((1, tI), lambda i, k: (0, k)),
            pl.BlockSpec((tI, H), lambda i, k: (k, 0)),
            pl.BlockSpec((1, H), lambda i, k: (0, 0)),
        ],
        out_specs=pl.BlockSpec((tr, H), lambda i, k: (i, 0)),
        scratch_shapes=[pltpu.VMEM((tr, H), jnp.float32)],
        compiler_params=pltpu.CompilerParams(
            dimension_semantics=("parallel", "arbitrary"),
            vmem_limit_bytes=vmem_limit),
    )(x2, w1, b1_2, w2, b2_2)
    return out.reshape(orig_shape)


# ---------------------------------------------------------------------------
# Module wrapper (parameter setup = glue; compute = Pallas kernels)
# ---------------------------------------------------------------------------
def make_student_mlp_params(key, hidden, intermediate, n_adjacent):
    ks = jax.random.split(key, 8)
    bound = float(np.sqrt(6.0 / (n_adjacent + 1)))   # xavier_uniform on (L, 1)
    return dict(
        # c_fc (hidden -> intermediate); subsets stored (L, in, out) = (L, H, I)
        fc_subset_w=jax.random.normal(ks[0], (n_adjacent, hidden, intermediate),
                                      jnp.float32) * 0.05,
        fc_subset_b=jax.random.normal(ks[1], (n_adjacent, intermediate),
                                      jnp.float32) * 0.05,
        fc_wl_w=jax.random.uniform(ks[2], (n_adjacent,), jnp.float32, -bound, bound),
        fc_wl_b=jax.random.uniform(ks[3], (n_adjacent,), jnp.float32, -bound, bound),
        fc_W_w=jnp.ones((hidden, intermediate), jnp.float32),
        fc_B_w=jnp.zeros((hidden, intermediate), jnp.float32),
        fc_W_b=jnp.ones((intermediate,), jnp.float32),
        fc_B_b=jnp.zeros((intermediate,), jnp.float32),
        # c_proj (intermediate -> hidden); subsets stored (L, in, out) = (L, I, H)
        proj_subset_w=jax.random.normal(ks[4], (n_adjacent, intermediate, hidden),
                                        jnp.float32) * 0.05,
        proj_subset_b=jax.random.normal(ks[5], (n_adjacent, hidden),
                                        jnp.float32) * 0.05,
        proj_wl_w=jax.random.uniform(ks[6], (n_adjacent,), jnp.float32, -bound, bound),
        proj_wl_b=jax.random.uniform(ks[7], (n_adjacent,), jnp.float32, -bound, bound),
        proj_W_w=jnp.ones((intermediate, hidden), jnp.float32),
        proj_B_w=jnp.zeros((intermediate, hidden), jnp.float32),
        proj_W_b=jnp.ones((hidden,), jnp.float32),
        proj_B_b=jnp.zeros((hidden,), jnp.float32),
    )


def precompute_student_weights(params, matmul_dtype=None):
    """WeightGenerator / BiasGenerator forwards.  For inference with fixed
    params, call this once and reuse (hoists the weight-gen HBM traffic)."""
    wdt = jnp.float32 if matmul_dtype is None else matmul_dtype
    w1 = generate_weight(params["fc_subset_w"], params["fc_wl_w"],
                         params["fc_W_w"], params["fc_B_w"], out_dtype=wdt)     # (H, I)
    b1 = generate_bias(params["fc_subset_b"], params["fc_wl_b"],
                       params["fc_W_b"], params["fc_B_b"])                      # (I,)
    w2 = generate_weight(params["proj_subset_w"], params["proj_wl_w"],
                         params["proj_W_w"], params["proj_B_w"], out_dtype=wdt)  # (I, H)
    b2 = generate_bias(params["proj_subset_b"], params["proj_wl_b"],
                       params["proj_W_b"], params["proj_B_b"])                  # (H,)
    return w1, b1, w2, b2


def student_mlp_forward(params, hidden_states, *, matmul_dtype=None):
    # TODO(synk): full fusion (generating W1/W2 tiles into VMEM scratch inside
    # the MLP kernel) would also remove the W1/W2 HBM write+read; left as a
    # follow-up — emitting bf16 from the generator already removes the extra
    # f32 round trip flagged in the review.
    w1, b1, w2, b2 = precompute_student_weights(params, matmul_dtype)
    return student_mlp(hidden_states, w1, b1, w2, b2, matmul_dtype=matmul_dtype)


if __name__ == "__main__":
    # Small config: hidden=32, intermediate=64, batch=2, seq=8, 3 adjacent
    # teacher layers per student layer.
    hidden, intermediate = 32, 64
    batch, seq = 2, 8
    n_adjacent = 3

    key = jax.random.PRNGKey(0)
    kp, kx = jax.random.split(key, 2)
    params = make_student_mlp_params(kp, hidden, intermediate, n_adjacent)
    hidden_states = jax.random.normal(kx, (batch, seq, hidden), jnp.float32)

    out = jax.block_until_ready(student_mlp_forward(params, hidden_states))

    # --- silent reference check (plain JAX) ---
    def gelu_new_ref(x):
        return 0.5 * x * (1.0 + jnp.tanh(_GELU_C * (x + 0.044715 * jnp.power(x, 3.0))))

    w1_ref = (jnp.tanh(jnp.einsum("lhi,l->hi", params["fc_subset_w"],
                                  params["fc_wl_w"])) * params["fc_W_w"]
              + params["fc_B_w"])                                        # (H, I)
    b1_ref = (jnp.tanh(jnp.einsum("li,l->i", params["fc_subset_b"],
                                  params["fc_wl_b"])) * params["fc_W_b"]
              + params["fc_B_b"])
    w2_ref = (jnp.tanh(jnp.einsum("lih,l->ih", params["proj_subset_w"],
                                  params["proj_wl_w"])) * params["proj_W_w"]
              + params["proj_B_w"])                                      # (I, H)
    b2_ref = (jnp.tanh(jnp.einsum("lh,l->h", params["proj_subset_b"],
                                  params["proj_wl_b"])) * params["proj_W_b"]
              + params["proj_B_b"])

    def ref_fwd(x):
        return gelu_new_ref(x @ w1_ref + b1_ref) @ w2_ref + b2_ref

    np.testing.assert_allclose(np.asarray(out), np.asarray(ref_fwd(hidden_states)),
                               rtol=1e-5, atol=1e-5)

    # bf16 MXU path (generator emits bf16 directly; x cast in-kernel) — looser tol.
    out_bf16 = jax.block_until_ready(
        student_mlp_forward(params, hidden_states, matmul_dtype=jnp.bfloat16))
    np.testing.assert_allclose(np.asarray(out_bf16), np.asarray(ref_fwd(hidden_states)),
                               rtol=5e-2, atol=5e-2)

    # Non-divisible row count exercises the masked partial row tile.
    x_odd = jax.random.normal(jax.random.PRNGKey(1), (4, 5, hidden), jnp.float32)
    out_odd = jax.block_until_ready(student_mlp_forward(params, x_odd))
    np.testing.assert_allclose(np.asarray(out_odd), np.asarray(ref_fwd(x_odd)),
                               rtol=1e-5, atol=1e-5)

    print("KERNEL_OK")
</pallas_src>

<mosaic_0001>
module attributes {stable_mosaic.version = 11 : i64} {
  func.func @_gen_weight_kernel(%arg0: i32, %arg1: i32, %arg2: memref<3x32x64xf32, #tpu.memory_space<vmem>>, %arg3: memref<3xf32, #tpu.memory_space<smem>>, %arg4: memref<32x64xf32, #tpu.memory_space<vmem>>, %arg5: memref<32x64xf32, #tpu.memory_space<vmem>>, %arg6: memref<32x64xf32, #tpu.memory_space<vmem>>) attributes {dimension_semantics = [#tpu.dimension_semantics<parallel>, #tpu.dimension_semantics<parallel>], iteration_bounds = array<i64: 1, 1>, scalar_prefetch = 0 : i64, scratch_operands = 0 : i64, tpu.core_type = #tpu.core_type<tc>, window_params = [{transform_indices = @transform_0, window_bounds = array<i64: 3, 32, 64>}, {transform_indices = @transform_1, window_bounds = array<i64: 3>}, {transform_indices = @transform_2, window_bounds = array<i64: 32, 64>}, {transform_indices = @transform_3, window_bounds = array<i64: 32, 64>}, {transform_indices = @transform_4, window_bounds = array<i64: 32, 64>}]} {
    %c0 = arith.constant 0 : index
    %c0_0 = arith.constant 0 : index
    %c0_1 = arith.constant 0 : index
    %0 = vector.load %arg2[%c0, %c0_0, %c0_1] : memref<3x32x64xf32, #tpu.memory_space<vmem>>, vector<1x32x64xf32>
    %1 = vector.shape_cast %0 : vector<1x32x64xf32> to vector<32x64xf32>
    %c0_2 = arith.constant 0 : index
    %2 = memref.load %arg3[%c0_2] : memref<3xf32, #tpu.memory_space<smem>>
    %3 = vector.broadcast %2 : f32 to vector<32x64xf32>
    %4 = arith.mulf %1, %3 : vector<32x64xf32>
    %c1 = arith.constant 1 : index
    %c0_3 = arith.constant 0 : index
    %c0_4 = arith.constant 0 : index
    %5 = vector.load %arg2[%c1, %c0_3, %c0_4] : memref<3x32x64xf32, #tpu.memory_space<vmem>>, vector<1x32x64xf32>
    %6 = vector.shape_cast %5 : vector<1x32x64xf32> to vector<32x64xf32>
    %c1_5 = arith.constant 1 : index
    %7 = memref.load %arg3[%c1_5] : memref<3xf32, #tpu.memory_space<smem>>
    %8 = vector.broadcast %7 : f32 to vector<32x64xf32>
    %9 = arith.mulf %6, %8 : vector<32x64xf32>
    %10 = arith.addf %4, %9 : vector<32x64xf32>
    %c2 = arith.constant 2 : index
    %c0_6 = arith.constant 0 : index
    %c0_7 = arith.constant 0 : index
    %11 = vector.load %arg2[%c2, %c0_6, %c0_7] : memref<3x32x64xf32, #tpu.memory_space<vmem>>, vector<1x32x64xf32>
    %12 = vector.shape_cast %11 : vector<1x32x64xf32> to vector<32x64xf32>
    %c2_8 = arith.constant 2 : index
    %13 = memref.load %arg3[%c2_8] : memref<3xf32, #tpu.memory_space<smem>>
    %14 = vector.broadcast %13 : f32 to vector<32x64xf32>
    %15 = arith.mulf %12, %14 : vector<32x64xf32>
    %16 = arith.addf %10, %15 : vector<32x64xf32>
    %17 = math.tanh %16 : vector<32x64xf32>
    %c0_9 = arith.constant 0 : index
    %c0_10 = arith.constant 0 : index
    %18 = vector.load %arg4[%c0_9, %c0_10] : memref<32x64xf32, #tpu.memory_space<vmem>>, vector<32x64xf32>
    %19 = arith.mulf %17, %18 : vector<32x64xf32>
    %c0_11 = arith.constant 0 : index
    %c0_12 = arith.constant 0 : index
    %20 = vector.load %arg5[%c0_11, %c0_12] : memref<32x64xf32, #tpu.memory_space<vmem>>, vector<32x64xf32>
    %21 = arith.addf %19, %20 : vector<32x64xf32>
    %c0_13 = arith.constant 0 : index
    %c0_14 = arith.constant 0 : index
    %22 = vector.load %arg6[%c0_13, %c0_14] : memref<32x64xf32, #tpu.memory_space<vmem>>, vector<32x64xf32>
    tpu.vector_store %arg6[%c0_13, %c0_14], %21 {strides = array<i32>} : memref<32x64xf32, #tpu.memory_space<vmem>>, vector<32x64xf32>,
    return
  }
  func.func @transform_0(%arg0: i32, %arg1: i32) -> (i32, i32, i32) {
    %c0_i32 = arith.constant 0 : i32
    %c0_i32_0 = arith.constant 0 : i32
    return %c0_i32, %arg0, %arg1 : i32, i32, i32
  }
  func.func @transform_1(%arg0: i32, %arg1: i32) -> i32 {
    %c0_i32 = arith.constant 0 : i32
    %c0_i32_0 = arith.constant 0 : i32
    return %c0_i32 : i32
  }
  func.func @transform_2(%arg0: i32, %arg1: i32) -> (i32, i32) {
    %c0_i32 = arith.constant 0 : i32
    return %arg0, %arg1 : i32, i32
  }
  func.func @transform_3(%arg0: i32, %arg1: i32) -> (i32, i32) {
    %c0_i32 = arith.constant 0 : i32
    return %arg0, %arg1 : i32, i32
  }
  func.func @transform_4(%arg0: i32, %arg1: i32) -> (i32, i32) {
    %c0_i32 = arith.constant 0 : i32
    return %arg0, %arg1 : i32, i32
  }
}

</mosaic_0001>

<llo_original>
// kernel: tpu_custom_call.1
$region0: #{tpu_custom_call.1}
  #allocation0 [shape = 'u32[]', space=smem, size = 0x4, offset = 0x4, fixed_abs, tag = 'smem constant byte address 0x4 - core index']
  #allocation1 [shape = 'u32[72,128]{1,0:T(1,128)}', space=vmem, size = 0x9000, scoped, tag = 'internal scratch']
  %s0 = inlined_call_operand.hbm [shape: f32[3,32,64], index: 0, kind: input, shape index: {}]
  %s1 = inlined_call_operand.hbm [shape: f32[3], index: 1, kind: input, shape index: {}]
  %s2 = inlined_call_operand.hbm [shape: f32[32,64], index: 2, kind: input, shape index: {}]
  %s3 = inlined_call_operand.hbm [shape: f32[32,64], index: 3, kind: input, shape index: {}]
  %s4 = inlined_call_operand.hbm [shape: f32[32,64], index: 4, kind: output, shape index: {}]
  %s5 = sld [smem:[#allocation0]]
  $region42: #{tpu_custom_call.1} parent=0
    _
  %s7 = ssub.s32 1, %s5
  %s8 = scalar_select 0, %s7, %s5
  $region1: #{tpu_custom_call.1} parent=0
    #allocation2 [shape = 'u8[49152]{0}', space=vmem, size = 0xc000, scoped, tag = 'input window, operand 0, single buffered']
    #allocation3 [shape = 's32[1]{0}', space=sflag, size = 0x4, scoped, tag = 'scoped memory for tpu_custom_call.1']
    #allocation4 [shape = 's32[1]{0}', space=sflag, size = 0x4, scoped, tag = 'scoped memory for tpu_custom_call.1']
    #allocation5 [shape = 's32[1]{0}', space=sflag, size = 0x4, scoped, tag = 'scoped memory for tpu_custom_call.1']
    #allocation6 [shape = 'u8[512]{0}', space=smem, size = 0x200, scoped, tag = 'input window, operand 1, single buffered']
    #allocation7 [shape = 'u8[16384]{0}', space=vmem, size = 0x4000, scoped, tag = 'input window, operand 2, single buffered']
    #allocation8 [shape = 's32[1]{0}', space=sflag, size = 0x4, scoped, tag = 'scoped memory for tpu_custom_call.1']
    #allocation9 [shape = 'u8[16384]{0}', space=vmem, size = 0x4000, scoped, tag = 'input window, operand 3, single buffered']
    #allocation10 [shape = 'u8[16384]{0}', space=vmem, size = 0x4000, scoped, tag = 'output window, operand 0, single buffered']
    %9 = vsyncpa [#allocation3], 0
    %10 = vsyncpa [#allocation5], 0
    %11 = vsyncpa [#allocation8], 0
    %12 = vsyncpa [#allocation4], 0
    // Predicated region
    $region2: #{tpu_custom_call.1} parent=1 // pred_check
      _
    $region3: #{tpu_custom_call.1} parent=1 // pred_check_branch
      %14 = sbr.rel (0) target = $region5
    $region4: #{tpu_custom_call.1} parent=1 // pred_region
      %16 = vsyncadd [#allocation3], 0
      %s17 = sshll.u32 %s0, 4
      %s18 = int_to_ptr.hbm [resolvable:$true] %s17
      %s19 = sshll.u32 [#allocation2], 4
      %s20 = int_to_ptr.vmem [resolvable:$true] %s19
      %25 = dma.hbm_to_vmem [thread:$0]  %s18, 1536, %s20, [#allocation3], 128, 128, 8
    $region5: #{tpu_custom_call.1} parent=1 // pred_fallthru
      _
    // Predicated region
    $region6: #{tpu_custom_call.1} parent=1 // pred_check
      _
    $region7: #{tpu_custom_call.1} parent=1 // pred_check_branch
      %27 = sbr.rel (0) target = $region9
    $region8: #{tpu_custom_call.1} parent=1 // pred_region
      %29 = vsyncadd [#allocation5], 0
      %s31 = sshll.u32 %s1, 4
      %s32 = int_to_ptr.hbm [resolvable:$true] %s31
      %34 = dma.hbm_to_smem %s32, 16, [#allocation6], [#allocation5]
    $region9: #{tpu_custom_call.1} parent=1 // pred_fallthru
      _
    // Predicated region
    $region10: #{tpu_custom_call.1} parent=1 // pred_check
      _
    $region11: #{tpu_custom_call.1} parent=1 // pred_check_branch
      %36 = sbr.rel (0) target = $region13
    $region12: #{tpu_custom_call.1} parent=1 // pred_region
      %38 = vsyncadd [#allocation8], 0
      %s39 = sshll.u32 %s2, 4
      %s40 = int_to_ptr.hbm [resolvable:$true] %s39
      %s41 = sshll.u32 [#allocation7], 4
      %s42 = int_to_ptr.vmem [resolvable:$true] %s41
      %47 = dma.hbm_to_vmem [thread:$0]  %s40, 512, %s42, [#allocation8], 128, 128, 8
    $region13: #{tpu_custom_call.1} parent=1 // pred_fallthru
      _
    // Predicated region
    $region14: #{tpu_custom_call.1} parent=1 // pred_check
      _
    $region15: #{tpu_custom_call.1} parent=1 // pred_check_branch
      %49 = sbr.rel (0) target = $region17
    $region16: #{tpu_custom_call.1} parent=1 // pred_region
      %51 = vsyncadd [#allocation8], 0
      %s52 = sshll.u32 %s3, 4
      %s53 = int_to_ptr.hbm [resolvable:$true] %s52
      %s54 = sshll.u32 [#allocation9], 4
      %s55 = int_to_ptr.vmem [resolvable:$true] %s54
      %60 = dma.hbm_to_vmem [thread:$0]  %s53, 512, %s55, [#allocation8], 128, 128, 8
    $region17: #{tpu_custom_call.1} parent=1 // pred_fallthru
      _
    // Predicated region
    $region18: #{tpu_custom_call.1} parent=1 // pred_check
      _
    $region19: #{tpu_custom_call.1} parent=1 // pred_check_branch
      %62 = sbr.rel (0) target = $region21
    $region20: #{tpu_custom_call.1} parent=1 // pred_region
      %64 = dma.done [#allocation3], 1536
    $region21: #{tpu_custom_call.1} parent=1 // pred_fallthru
      _
    // Predicated region
    $region22: #{tpu_custom_call.1} parent=1 // pred_check
      _
    $region23: #{tpu_custom_call.1} parent=1 // pred_check_branch
      %66 = sbr.rel (0) target = $region25
    $region24: #{tpu_custom_call.1} parent=1 // pred_region
      %68 = dma.done [#allocation5], 16
    $region25: #{tpu_custom_call.1} parent=1 // pred_fallthru
      _
    // Predicated region
    $region26: #{tpu_custom_call.1} parent=1 // pred_check
      _
    $region27: #{tpu_custom_call.1} parent=1 // pred_check_branch
      %70 = sbr.rel (0) target = $region29
    $region28: #{tpu_custom_call.1} parent=1 // pred_region
      %72 = dma.done [#allocation8], 512
    $region29: #{tpu_custom_call.1} parent=1 // pred_fallthru
      _
    // Predicated region
    $region30: #{tpu_custom_call.1} parent=1 // pred_check
      _
    $region31: #{tpu_custom_call.1} parent=1 // pred_check_branch
      %74 = sbr.rel (0) target = $region33
    $region32: #{tpu_custom_call.1} parent=1 // pred_region
      %76 = dma.done [#allocation8], 512
    $region33: #{tpu_custom_call.1} parent=1 // pred_fallthru
      _
    %77 = sfence
    %v78 = vld [vmem:[#allocation2] sm:$0xff]
    %v79 = vld [vmem:[#allocation2 + $0x8] sm:$0xff]
    %v80 = vld [vmem:[#allocation2 + $0x10] sm:$0xff]
    %v81 = vld [vmem:[#allocation2 + $0x18] sm:$0xff]
    %s82 = sld [smem:[#allocation6]]
    %v83 = vstv %s82
    %v84 = vmul.f32 %v78, %v83
    %v85 = vmul.f32 %v79, %v83
    %v86 = vmul.f32 %v80, %v83
    %v87 = vmul.f32 %v81, %v83
    %s88 = scalar_lea.vmem [#allocation2], 32
    %v89 = vld [vmem:[%s88] sm:$0xff]
    %v90 = vld [vmem:[%s88 + $0x8] sm:$0xff]
    %v91 = vld [vmem:[%s88 + $0x10] sm:$0xff]
    %v92 = vld [vmem:[%s88 + $0x18] sm:$0xff]
    %s93 = sld [smem:[#allocation6 + $0x1]]
    %v94 = vstv %s93
    %v95 = vmul.f32 %v89, %v94
    %v96 = vmul.f32 %v90, %v94
    %v97 = vmul.f32 %v91, %v94
    %v98 = vmul.f32 %v92, %v94
    %v99 = vadd.f32 %v84, %v95
    %v100 = vadd.f32 %v85, %v96
    %v101 = vadd.f32 %v86, %v97
    %v102 = vadd.f32 %v87, %v98
    %s103 = scalar_lea.vmem [#allocation2], 64
    %v104 = vld [vmem:[%s103] sm:$0xff]
    %v105 = vld [vmem:[%s103 + $0x8] sm:$0xff]
    %v106 = vld [vmem:[%s103 + $0x10] sm:$0xff]
    %v107 = vld [vmem:[%s103 + $0x18] sm:$0xff]
    %s108 = sld [smem:[#allocation6 + $0x2]]
    %v109 = vstv %s108
    %v110 = vmul.f32 %v104, %v109
    %v111 = vmul.f32 %v105, %v109
    %v112 = vmul.f32 %v106, %v109
    %v113 = vmul.f32 %v107, %v109
    %v114 = vadd.f32 %v99, %v110
    %v115 = vadd.f32 %v100, %v111
    %v116 = vadd.f32 %v101, %v112
    %v117 = vadd.f32 %v102, %v113
    %v118 = vtanh.pop %v114
    %v119 = vtanh.pop %v115
    %v120 = vtanh.pop %v116
    %v121 = vtanh.pop %v117
    %v122 = vld [vmem:[#allocation7] sm:$0xff]
    %v123 = vld [vmem:[#allocation7 + $0x8] sm:$0xff]
    %v124 = vld [vmem:[#allocation7 + $0x10] sm:$0xff]
    %v125 = vld [vmem:[#allocation7 + $0x18] sm:$0xff]
    %v126 = vmul.f32 %v118, %v122
    %v127 = vmul.f32 %v119, %v123
    %v128 = vmul.f32 %v120, %v124
    %v129 = vmul.f32 %v121, %v125
    %v130 = vld [vmem:[#allocation9] sm:$0xff]
    %v131 = vld [vmem:[#allocation9 + $0x8] sm:$0xff]
    %v132 = vld [vmem:[#allocation9 + $0x10] sm:$0xff]
    %v133 = vld [vmem:[#allocation9 + $0x18] sm:$0xff]
    %v134 = vadd.f32 %v126, %v130
    %v135 = vadd.f32 %v127, %v131
    %v136 = vadd.f32 %v128, %v132
    %v137 = vadd.f32 %v129, %v133
    %vm138 = vcmask 523264
    %139 = vst.msk [vmem:[#allocation10] sm:$0xff] %vm138, %v134
    %140 = vst.msk [vmem:[#allocation10 + $0x8] sm:$0xff] %vm138, %v135
    %141 = vst.msk [vmem:[#allocation10 + $0x10] sm:$0xff] %vm138, %v136
    %142 = vst.msk [vmem:[#allocation10 + $0x18] sm:$0xff] %vm138, %v137
    // Predicated region
    $region34: #{tpu_custom_call.1} parent=1 // pred_check
      _
    $region35: #{tpu_custom_call.1} parent=1 // pred_check_branch
      %144 = sbr.rel (0) target = $region37
    $region36: #{tpu_custom_call.1} parent=1 // pred_region
      %146 = vsyncadd [#allocation4], 0
      %s147 = sshll.u32 [#allocation10], 4
      %s148 = int_to_ptr.vmem [resolvable:$true] %s147
      %s149 = sshll.u32 %s4, 4
      %s150 = int_to_ptr.hbm [resolvable:$true] %s149
      %155 = dma.vmem_to_hbm [thread:$0]  %s148, 512, %s150, [#allocation4], 128, 128, 8
    $region37: #{tpu_custom_call.1} parent=1 // pred_fallthru
      _
    // Predicated region
    $region38: #{tpu_custom_call.1} parent=1 // pred_check
      _
    $region39: #{tpu_custom_call.1} parent=1 // pred_check_branch
      %157 = sbr.rel (0) target = $region41
    $region40: #{tpu_custom_call.1} parent=1 // pred_region
      %159 = dma.done [#allocation4], 512
    $region41: #{tpu_custom_call.1} parent=1 // pred_fallthru
      _
    %160 = vsyncpa [#allocation3], 1
    %161 = vsyncpa [#allocation8], 1
    %162 = vsyncpa [#allocation4], 1
    %163 = vsyncpa [#allocation5], 1

</llo_original>
